<compile_context>
chip_gen: v7x
topology: tpu7x:2x2x1
jax: 0.10.0
libtpu: 0.0.40
codegen_flags: <defaults>
</compile_context>

<pallas_src>
import functools

import jax
import jax.numpy as jnp
from jax.experimental import pallas as pl
from jax.experimental.pallas import tpu as pltpu


_MAX_ROWS_PER_STEP = 32  # multiple of 8; amortizes ~0.35us/step overhead


def _pick_rows_per_step(batch):
    """Largest multiple-of-8 rows/step <= _MAX_ROWS_PER_STEP, but keep the
    grid at >= 2 steps when the batch allows (so v7x's 2 TCs both work)."""
    rps = _MAX_ROWS_PER_STEP
    while rps > 8 and pl.cdiv(batch, rps) < 2:
        rps //= 2
    return rps


def _gather_kernel(labels_ref, table_hbm, out_ref, sem, *, rows_per_step):
    # labels_ref : (B_pad,) int32 in SMEM (scalar prefetch)
    # table_hbm  : (C1, Hp) table left in HBM (memory_space=pl.ANY)
    # out_ref    : (rows_per_step, Hp) output tile in VMEM
    # sem        : (rows_per_step,) DMA semaphores
    base = pl.program_id(0) * rows_per_step
    copies = []
    # Issue all row-gather DMAs (HBM -> output tile directly), then wait.
    for j in range(rows_per_step):
        row = labels_ref[base + j]
        cp = pltpu.make_async_copy(
            table_hbm.at[pl.ds(row, 1), :],
            out_ref.at[pl.ds(j, 1), :],
            sem.at[j],
        )
        cp.start()
        copies.append(cp)
    for cp in copies:
        cp.wait()


def embedding_lookup(labels, table):
    """Pallas embedding gather: out[b, :] = table[labels[b], :]."""
    B = labels.shape[0]
    C1, H = table.shape
    dtype_bytes = jnp.dtype(table.dtype).itemsize

    rps = _pick_rows_per_step(B)
    B_pad = pl.cdiv(B, rps) * rps

    # Lane-dense output: pad hidden size to a multiple of 128 (no-op for
    # DiT sizes 384/768/1152).  Non-128-multiple H would otherwise turn every
    # store into masked partial stores.
    Hp = pl.cdiv(H, 128) * 128
    table_p = table if Hp == H else jnp.pad(table, ((0, 0), (0, Hp - H)))

    # NOTE: nn.Embedding *raises* on out-of-range indices; we clamp instead so
    # the data-dependent DMA can never read out of bounds.  In particular, if
    # dropout_prob == 0 but force_drop_ids is passed, token_drop writes
    # `num_classes`, which is out of range for the num_classes-row table and
    # would be silently clamped here — that is a usage bug upstream, not a
    # supported path.
    labels_i32 = jnp.clip(labels.astype(jnp.int32), 0, C1 - 1)
    labels_pad = jnp.pad(labels_i32, (0, B_pad - B))  # tail gathers row 0

    kernel = functools.partial(_gather_kernel, rows_per_step=rps)

    out = pl.pallas_call(
        kernel,
        out_shape=jax.ShapeDtypeStruct((B_pad, Hp), table.dtype),
        grid_spec=pltpu.PrefetchScalarGridSpec(
            num_scalar_prefetch=1,
            grid=(B_pad // rps,),
            in_specs=[pl.BlockSpec(memory_space=pl.ANY)],  # table stays in HBM
            out_specs=pl.BlockSpec((rps, Hp), lambda i, labels_ref: (i, 0)),
            scratch_shapes=[pltpu.SemaphoreType.DMA((rps,))],
        ),
        compiler_params=pltpu.CompilerParams(
            dimension_semantics=("parallel",)),
        cost_estimate=pl.CostEstimate(
            flops=0,
            transcendentals=0,
            bytes_accessed=2 * B_pad * Hp * dtype_bytes + 4 * B_pad),
    )(labels_pad, table_p)
    return out[:B, :H]


class LabelEmbedder:
    """JAX/Pallas port of the PyTorch LabelEmbedder."""

    def __init__(self, num_classes, hidden_size, dropout_prob, key,
                 dtype=jnp.float32):
        use_cfg_embedding = int(dropout_prob > 0)
        self.num_classes = num_classes
        self.dropout_prob = dropout_prob
        # nn.Embedding default init: N(0, 1); deterministic via PRNGKey.
        self.embedding_table = jax.random.normal(
            key, (num_classes + use_cfg_embedding, hidden_size)).astype(dtype)

    def token_drop(self, labels, rng=None, force_drop_ids=None):
        if force_drop_ids is None:
            drop_ids = (jax.random.uniform(rng, (labels.shape[0],))
                        < self.dropout_prob)
        else:
            drop_ids = force_drop_ids == 1
        return jnp.where(drop_ids, self.num_classes, labels)

    def __call__(self, labels, train, rng=None, force_drop_ids=None):
        use_dropout = self.dropout_prob > 0
        if (train and use_dropout) or (force_drop_ids is not None):
            labels = self.token_drop(labels, rng, force_drop_ids)
        return embedding_lookup(labels, self.embedding_table)


if __name__ == "__main__":
    key = jax.random.PRNGKey(0)
    k_tab, k_lab, k_drop, k_lab2 = jax.random.split(key, 4)

    num_classes, hidden_size, dropout_prob = 16, 128, 0.1
    B = 8

    embedder = LabelEmbedder(num_classes, hidden_size, dropout_prob, k_tab)
    labels = jax.random.randint(k_lab, (B,), 0, num_classes, dtype=jnp.int32)

    # Eval path: plain lookup.
    out_eval = embedder(labels, train=False)

    # Train path with deterministic forced drops (exercises CFG token drop).
    force_drop_ids = jnp.array([1, 0, 0, 1, 0, 0, 0, 1], dtype=jnp.int32)
    out_train = embedder(labels, train=True, rng=k_drop,
                         force_drop_ids=force_drop_ids)

    # Larger batch: exercises multi-step grid + padded tail rows.
    B2 = 20
    labels2 = jax.random.randint(k_lab2, (B2,), 0, num_classes,
                                 dtype=jnp.int32)
    out_big = embedder(labels2, train=False)

    jax.block_until_ready((out_eval, out_train, out_big))

    # Reference check against plain-JAX embedding lookup.
    ref_eval = jnp.take(embedder.embedding_table, labels, axis=0)
    dropped = jnp.where(force_drop_ids == 1, num_classes, labels)
    ref_train = jnp.take(embedder.embedding_table, dropped, axis=0)
    ref_big = jnp.take(embedder.embedding_table, labels2, axis=0)

    assert out_eval.shape == (B, hidden_size)
    assert out_train.shape == (B, hidden_size)
    assert out_big.shape == (B2, hidden_size)
    assert jnp.allclose(out_eval, ref_eval, atol=0.0)
    assert jnp.allclose(out_train, ref_train, atol=0.0)
    assert jnp.allclose(out_big, ref_big, atol=0.0)

    print("KERNEL_OK")
</pallas_src>

<mosaic_0001>
module attributes {stable_mosaic.version = 11 : i64} {
  func.func @_gather_kernel(%arg0: i32, %arg1: memref<8xi32, #tpu.memory_space<smem>>, %arg2: memref<17x128xf32, #tpu.memory_space<any>>, %arg3: memref<8x128xf32, #tpu.memory_space<vmem>>, %arg4: memref<8x!tpu.dma_semaphore, #tpu.memory_space<semaphore_mem>>) attributes {dimension_semantics = [#tpu.dimension_semantics<parallel>], iteration_bounds = array<i64: 1>, scalar_prefetch = 1 : i64, scratch_operands = 1 : i64, tpu.core_type = #tpu.core_type<tc>, window_params = [{}, {transform_indices = @transform_1, window_bounds = array<i64: 8, 128>}]} {
    %c8_i32 = arith.constant 8 : i32
    %0 = arith.muli %arg0, %c8_i32 : i32
    %c0_i32 = arith.constant 0 : i32
    %1 = arith.addi %0, %c0_i32 : i32
    %2 = arith.index_cast %1 : i32 to index
    %3 = memref.load %arg1[%2] : memref<8xi32, #tpu.memory_space<smem>>
    %c0_i32_0 = arith.constant 0 : i32
    %c0_i32_1 = arith.constant 0 : i32
    %4 = tpu.memref_slice %arg2[%3, %c0_i32_1] : memref<17x128xf32, #tpu.memory_space<any>> -> memref<1x128xf32, #tpu.memory_space<any>>
    %c0_i32_2 = arith.constant 0 : i32
    %c0_i32_3 = arith.constant 0 : i32
    %5 = tpu.memref_slice %arg3[%c0_i32_2, %c0_i32_3] : memref<8x128xf32, #tpu.memory_space<vmem>> -> memref<1x128xf32, #tpu.memory_space<vmem>>
    %6 = tpu.memref_slice %arg4[%c0_i32_0] : memref<8x!tpu.dma_semaphore, #tpu.memory_space<semaphore_mem>> -> memref<1x!tpu.dma_semaphore, #tpu.memory_space<semaphore_mem>>
    %7 = tpu.memref_squeeze %6 : memref<1x!tpu.dma_semaphore, #tpu.memory_space<semaphore_mem>> -> memref<!tpu.dma_semaphore, #tpu.memory_space<semaphore_mem>>
    tpu.enqueue_dma source(%4 : memref<1x128xf32, #tpu.memory_space<any>>) target(%5 : memref<1x128xf32, #tpu.memory_space<vmem>>) target_semaphore(%7 : memref<!tpu.dma_semaphore, #tpu.memory_space<semaphore_mem>>)
    %c1_i32 = arith.constant 1 : i32
    %8 = arith.addi %0, %c1_i32 : i32
    %9 = arith.index_cast %8 : i32 to index
    %10 = memref.load %arg1[%9] : memref<8xi32, #tpu.memory_space<smem>>
    %c1_i32_4 = arith.constant 1 : i32
    %c0_i32_5 = arith.constant 0 : i32
    %11 = tpu.memref_slice %arg2[%10, %c0_i32_5] : memref<17x128xf32, #tpu.memory_space<any>> -> memref<1x128xf32, #tpu.memory_space<any>>
    %c1_i32_6 = arith.constant 1 : i32
    %c0_i32_7 = arith.constant 0 : i32
    %12 = tpu.memref_slice %arg3[%c1_i32_6, %c0_i32_7] : memref<8x128xf32, #tpu.memory_space<vmem>> -> memref<1x128xf32, #tpu.memory_space<vmem>>
    %13 = tpu.memref_slice %arg4[%c1_i32_4] : memref<8x!tpu.dma_semaphore, #tpu.memory_space<semaphore_mem>> -> memref<1x!tpu.dma_semaphore, #tpu.memory_space<semaphore_mem>>
    %14 = tpu.memref_squeeze %13 : memref<1x!tpu.dma_semaphore, #tpu.memory_space<semaphore_mem>> -> memref<!tpu.dma_semaphore, #tpu.memory_space<semaphore_mem>>
    tpu.enqueue_dma source(%11 : memref<1x128xf32, #tpu.memory_space<any>>) target(%12 : memref<1x128xf32, #tpu.memory_space<vmem>>) target_semaphore(%14 : memref<!tpu.dma_semaphore, #tpu.memory_space<semaphore_mem>>)
    %c2_i32 = arith.constant 2 : i32
    %15 = arith.addi %0, %c2_i32 : i32
    %16 = arith.index_cast %15 : i32 to index
    %17 = memref.load %arg1[%16] : memref<8xi32, #tpu.memory_space<smem>>
    %c2_i32_8 = arith.constant 2 : i32
    %c0_i32_9 = arith.constant 0 : i32
    %18 = tpu.memref_slice %arg2[%17, %c0_i32_9] : memref<17x128xf32, #tpu.memory_space<any>> -> memref<1x128xf32, #tpu.memory_space<any>>
    %c2_i32_10 = arith.constant 2 : i32
    %c0_i32_11 = arith.constant 0 : i32
    %19 = tpu.memref_slice %arg3[%c2_i32_10, %c0_i32_11] : memref<8x128xf32, #tpu.memory_space<vmem>> -> memref<1x128xf32, #tpu.memory_space<vmem>>
    %20 = tpu.memref_slice %arg4[%c2_i32_8] : memref<8x!tpu.dma_semaphore, #tpu.memory_space<semaphore_mem>> -> memref<1x!tpu.dma_semaphore, #tpu.memory_space<semaphore_mem>>
    %21 = tpu.memref_squeeze %20 : memref<1x!tpu.dma_semaphore, #tpu.memory_space<semaphore_mem>> -> memref<!tpu.dma_semaphore, #tpu.memory_space<semaphore_mem>>
    tpu.enqueue_dma source(%18 : memref<1x128xf32, #tpu.memory_space<any>>) target(%19 : memref<1x128xf32, #tpu.memory_space<vmem>>) target_semaphore(%21 : memref<!tpu.dma_semaphore, #tpu.memory_space<semaphore_mem>>)
    %c3_i32 = arith.constant 3 : i32
    %22 = arith.addi %0, %c3_i32 : i32
    %23 = arith.index_cast %22 : i32 to index
    %24 = memref.load %arg1[%23] : memref<8xi32, #tpu.memory_space<smem>>
    %c3_i32_12 = arith.constant 3 : i32
    %c0_i32_13 = arith.constant 0 : i32
    %25 = tpu.memref_slice %arg2[%24, %c0_i32_13] : memref<17x128xf32, #tpu.memory_space<any>> -> memref<1x128xf32, #tpu.memory_space<any>>
    %c3_i32_14 = arith.constant 3 : i32
    %c0_i32_15 = arith.constant 0 : i32
    %26 = tpu.memref_slice %arg3[%c3_i32_14, %c0_i32_15] : memref<8x128xf32, #tpu.memory_space<vmem>> -> memref<1x128xf32, #tpu.memory_space<vmem>>
    %27 = tpu.memref_slice %arg4[%c3_i32_12] : memref<8x!tpu.dma_semaphore, #tpu.memory_space<semaphore_mem>> -> memref<1x!tpu.dma_semaphore, #tpu.memory_space<semaphore_mem>>
    %28 = tpu.memref_squeeze %27 : memref<1x!tpu.dma_semaphore, #tpu.memory_space<semaphore_mem>> -> memref<!tpu.dma_semaphore, #tpu.memory_space<semaphore_mem>>
    tpu.enqueue_dma source(%25 : memref<1x128xf32, #tpu.memory_space<any>>) target(%26 : memref<1x128xf32, #tpu.memory_space<vmem>>) target_semaphore(%28 : memref<!tpu.dma_semaphore, #tpu.memory_space<semaphore_mem>>)
    %c4_i32 = arith.constant 4 : i32
    %29 = arith.addi %0, %c4_i32 : i32
    %30 = arith.index_cast %29 : i32 to index
    %31 = memref.load %arg1[%30] : memref<8xi32, #tpu.memory_space<smem>>
    %c4_i32_16 = arith.constant 4 : i32
    %c0_i32_17 = arith.constant 0 : i32
    %32 = tpu.memref_slice %arg2[%31, %c0_i32_17] : memref<17x128xf32, #tpu.memory_space<any>> -> memref<1x128xf32, #tpu.memory_space<any>>
    %c4_i32_18 = arith.constant 4 : i32
    %c0_i32_19 = arith.constant 0 : i32
    %33 = tpu.memref_slice %arg3[%c4_i32_18, %c0_i32_19] : memref<8x128xf32, #tpu.memory_space<vmem>> -> memref<1x128xf32, #tpu.memory_space<vmem>>
    %34 = tpu.memref_slice %arg4[%c4_i32_16] : memref<8x!tpu.dma_semaphore, #tpu.memory_space<semaphore_mem>> -> memref<1x!tpu.dma_semaphore, #tpu.memory_space<semaphore_mem>>
    %35 = tpu.memref_squeeze %34 : memref<1x!tpu.dma_semaphore, #tpu.memory_space<semaphore_mem>> -> memref<!tpu.dma_semaphore, #tpu.memory_space<semaphore_mem>>
    tpu.enqueue_dma source(%32 : memref<1x128xf32, #tpu.memory_space<any>>) target(%33 : memref<1x128xf32, #tpu.memory_space<vmem>>) target_semaphore(%35 : memref<!tpu.dma_semaphore, #tpu.memory_space<semaphore_mem>>)
    %c5_i32 = arith.constant 5 : i32
    %36 = arith.addi %0, %c5_i32 : i32
    %37 = arith.index_cast %36 : i32 to index
    %38 = memref.load %arg1[%37] : memref<8xi32, #tpu.memory_space<smem>>
    %c5_i32_20 = arith.constant 5 : i32
    %c0_i32_21 = arith.constant 0 : i32
    %39 = tpu.memref_slice %arg2[%38, %c0_i32_21] : memref<17x128xf32, #tpu.memory_space<any>> -> memref<1x128xf32, #tpu.memory_space<any>>
    %c5_i32_22 = arith.constant 5 : i32
    %c0_i32_23 = arith.constant 0 : i32
    %40 = tpu.memref_slice %arg3[%c5_i32_22, %c0_i32_23] : memref<8x128xf32, #tpu.memory_space<vmem>> -> memref<1x128xf32, #tpu.memory_space<vmem>>
    %41 = tpu.memref_slice %arg4[%c5_i32_20] : memref<8x!tpu.dma_semaphore, #tpu.memory_space<semaphore_mem>> -> memref<1x!tpu.dma_semaphore, #tpu.memory_space<semaphore_mem>>
    %42 = tpu.memref_squeeze %41 : memref<1x!tpu.dma_semaphore, #tpu.memory_space<semaphore_mem>> -> memref<!tpu.dma_semaphore, #tpu.memory_space<semaphore_mem>>
    tpu.enqueue_dma source(%39 : memref<1x128xf32, #tpu.memory_space<any>>) target(%40 : memref<1x128xf32, #tpu.memory_space<vmem>>) target_semaphore(%42 : memref<!tpu.dma_semaphore, #tpu.memory_space<semaphore_mem>>)
    %c6_i32 = arith.constant 6 : i32
    %43 = arith.addi %0, %c6_i32 : i32
    %44 = arith.index_cast %43 : i32 to index
    %45 = memref.load %arg1[%44] : memref<8xi32, #tpu.memory_space<smem>>
    %c6_i32_24 = arith.constant 6 : i32
    %c0_i32_25 = arith.constant 0 : i32
    %46 = tpu.memref_slice %arg2[%45, %c0_i32_25] : memref<17x128xf32, #tpu.memory_space<any>> -> memref<1x128xf32, #tpu.memory_space<any>>
    %c6_i32_26 = arith.constant 6 : i32
    %c0_i32_27 = arith.constant 0 : i32
    %47 = tpu.memref_slice %arg3[%c6_i32_26, %c0_i32_27] : memref<8x128xf32, #tpu.memory_space<vmem>> -> memref<1x128xf32, #tpu.memory_space<vmem>>
    %48 = tpu.memref_slice %arg4[%c6_i32_24] : memref<8x!tpu.dma_semaphore, #tpu.memory_space<semaphore_mem>> -> memref<1x!tpu.dma_semaphore, #tpu.memory_space<semaphore_mem>>
    %49 = tpu.memref_squeeze %48 : memref<1x!tpu.dma_semaphore, #tpu.memory_space<semaphore_mem>> -> memref<!tpu.dma_semaphore, #tpu.memory_space<semaphore_mem>>
    tpu.enqueue_dma source(%46 : memref<1x128xf32, #tpu.memory_space<any>>) target(%47 : memref<1x128xf32, #tpu.memory_space<vmem>>) target_semaphore(%49 : memref<!tpu.dma_semaphore, #tpu.memory_space<semaphore_mem>>)
    %c7_i32 = arith.constant 7 : i32
    %50 = arith.addi %0, %c7_i32 : i32
    %51 = arith.index_cast %50 : i32 to index
    %52 = memref.load %arg1[%51] : memref<8xi32, #tpu.memory_space<smem>>
    %c7_i32_28 = arith.constant 7 : i32
    %c0_i32_29 = arith.constant 0 : i32
    %53 = tpu.memref_slice %arg2[%52, %c0_i32_29] : memref<17x128xf32, #tpu.memory_space<any>> -> memref<1x128xf32, #tpu.memory_space<any>>
    %c7_i32_30 = arith.constant 7 : i32
    %c0_i32_31 = arith.constant 0 : i32
    %54 = tpu.memref_slice %arg3[%c7_i32_30, %c0_i32_31] : memref<8x128xf32, #tpu.memory_space<vmem>> -> memref<1x128xf32, #tpu.memory_space<vmem>>
    %55 = tpu.memref_slice %arg4[%c7_i32_28] : memref<8x!tpu.dma_semaphore, #tpu.memory_space<semaphore_mem>> -> memref<1x!tpu.dma_semaphore, #tpu.memory_space<semaphore_mem>>
    %56 = tpu.memref_squeeze %55 : memref<1x!tpu.dma_semaphore, #tpu.memory_space<semaphore_mem>> -> memref<!tpu.dma_semaphore, #tpu.memory_space<semaphore_mem>>
    tpu.enqueue_dma source(%53 : memref<1x128xf32, #tpu.memory_space<any>>) target(%54 : memref<1x128xf32, #tpu.memory_space<vmem>>) target_semaphore(%56 : memref<!tpu.dma_semaphore, #tpu.memory_space<semaphore_mem>>)
    %c0_i32_32 = arith.constant 0 : i32
    %c0_i32_33 = arith.constant 0 : i32
    %57 = tpu.memref_slice %arg2[%3, %c0_i32_33] : memref<17x128xf32, #tpu.memory_space<any>> -> memref<1x128xf32, #tpu.memory_space<any>>
    %c0_i32_34 = arith.constant 0 : i32
    %c0_i32_35 = arith.constant 0 : i32
    %58 = tpu.memref_slice %arg3[%c0_i32_34, %c0_i32_35] : memref<8x128xf32, #tpu.memory_space<vmem>> -> memref<1x128xf32, #tpu.memory_space<vmem>>
    %59 = tpu.memref_slice %arg4[%c0_i32_32] : memref<8x!tpu.dma_semaphore, #tpu.memory_space<semaphore_mem>> -> memref<1x!tpu.dma_semaphore, #tpu.memory_space<semaphore_mem>>
    %60 = tpu.memref_squeeze %59 : memref<1x!tpu.dma_semaphore, #tpu.memory_space<semaphore_mem>> -> memref<!tpu.dma_semaphore, #tpu.memory_space<semaphore_mem>>
    tpu.wait_dma2 semaphore(%60 : memref<!tpu.dma_semaphore, #tpu.memory_space<semaphore_mem>>) src(%57 : memref<1x128xf32, #tpu.memory_space<any>>) dst(%58 : memref<1x128xf32, #tpu.memory_space<vmem>>)
    %c1_i32_36 = arith.constant 1 : i32
    %c0_i32_37 = arith.constant 0 : i32
    %61 = tpu.memref_slice %arg2[%10, %c0_i32_37] : memref<17x128xf32, #tpu.memory_space<any>> -> memref<1x128xf32, #tpu.memory_space<any>>
    %c1_i32_38 = arith.constant 1 : i32
    %c0_i32_39 = arith.constant 0 : i32
    %62 = tpu.memref_slice %arg3[%c1_i32_38, %c0_i32_39] : memref<8x128xf32, #tpu.memory_space<vmem>> -> memref<1x128xf32, #tpu.memory_space<vmem>>
    %63 = tpu.memref_slice %arg4[%c1_i32_36] : memref<8x!tpu.dma_semaphore, #tpu.memory_space<semaphore_mem>> -> memref<1x!tpu.dma_semaphore, #tpu.memory_space<semaphore_mem>>
    %64 = tpu.memref_squeeze %63 : memref<1x!tpu.dma_semaphore, #tpu.memory_space<semaphore_mem>> -> memref<!tpu.dma_semaphore, #tpu.memory_space<semaphore_mem>>
    tpu.wait_dma2 semaphore(%64 : memref<!tpu.dma_semaphore, #tpu.memory_space<semaphore_mem>>) src(%61 : memref<1x128xf32, #tpu.memory_space<any>>) dst(%62 : memref<1x128xf32, #tpu.memory_space<vmem>>)
    %c2_i32_40 = arith.constant 2 : i32
    %c0_i32_41 = arith.constant 0 : i32
    %65 = tpu.memref_slice %arg2[%17, %c0_i32_41] : memref<17x128xf32, #tpu.memory_space<any>> -> memref<1x128xf32, #tpu.memory_space<any>>
    %c2_i32_42 = arith.constant 2 : i32
    %c0_i32_43 = arith.constant 0 : i32
    %66 = tpu.memref_slice %arg3[%c2_i32_42, %c0_i32_43] : memref<8x128xf32, #tpu.memory_space<vmem>> -> memref<1x128xf32, #tpu.memory_space<vmem>>
    %67 = tpu.memref_slice %arg4[%c2_i32_40] : memref<8x!tpu.dma_semaphore, #tpu.memory_space<semaphore_mem>> -> memref<1x!tpu.dma_semaphore, #tpu.memory_space<semaphore_mem>>
    %68 = tpu.memref_squeeze %67 : memref<1x!tpu.dma_semaphore, #tpu.memory_space<semaphore_mem>> -> memref<!tpu.dma_semaphore, #tpu.memory_space<semaphore_mem>>
    tpu.wait_dma2 semaphore(%68 : memref<!tpu.dma_semaphore, #tpu.memory_space<semaphore_mem>>) src(%65 : memref<1x128xf32, #tpu.memory_space<any>>) dst(%66 : memref<1x128xf32, #tpu.memory_space<vmem>>)
    %c3_i32_44 = arith.constant 3 : i32
    %c0_i32_45 = arith.constant 0 : i32
    %69 = tpu.memref_slice %arg2[%24, %c0_i32_45] : memref<17x128xf32, #tpu.memory_space<any>> -> memref<1x128xf32, #tpu.memory_space<any>>
    %c3_i32_46 = arith.constant 3 : i32
    %c0_i32_47 = arith.constant 0 : i32
    %70 = tpu.memref_slice %arg3[%c3_i32_46, %c0_i32_47] : memref<8x128xf32, #tpu.memory_space<vmem>> -> memref<1x128xf32, #tpu.memory_space<vmem>>
    %71 = tpu.memref_slice %arg4[%c3_i32_44] : memref<8x!tpu.dma_semaphore, #tpu.memory_space<semaphore_mem>> -> memref<1x!tpu.dma_semaphore, #tpu.memory_space<semaphore_mem>>
    %72 = tpu.memref_squeeze %71 : memref<1x!tpu.dma_semaphore, #tpu.memory_space<semaphore_mem>> -> memref<!tpu.dma_semaphore, #tpu.memory_space<semaphore_mem>>
    tpu.wait_dma2 semaphore(%72 : memref<!tpu.dma_semaphore, #tpu.memory_space<semaphore_mem>>) src(%69 : memref<1x128xf32, #tpu.memory_space<any>>) dst(%70 : memref<1x128xf32, #tpu.memory_space<vmem>>)
    %c4_i32_48 = arith.constant 4 : i32
    %c0_i32_49 = arith.constant 0 : i32
    %73 = tpu.memref_slice %arg2[%31, %c0_i32_49] : memref<17x128xf32, #tpu.memory_space<any>> -> memref<1x128xf32, #tpu.memory_space<any>>
    %c4_i32_50 = arith.constant 4 : i32
    %c0_i32_51 = arith.constant 0 : i32
    %74 = tpu.memref_slice %arg3[%c4_i32_50, %c0_i32_51] : memref<8x128xf32, #tpu.memory_space<vmem>> -> memref<1x128xf32, #tpu.memory_space<vmem>>
    %75 = tpu.memref_slice %arg4[%c4_i32_48] : memref<8x!tpu.dma_semaphore, #tpu.memory_space<semaphore_mem>> -> memref<1x!tpu.dma_semaphore, #tpu.memory_space<semaphore_mem>>
    %76 = tpu.memref_squeeze %75 : memref<1x!tpu.dma_semaphore, #tpu.memory_space<semaphore_mem>> -> memref<!tpu.dma_semaphore, #tpu.memory_space<semaphore_mem>>
    tpu.wait_dma2 semaphore(%76 : memref<!tpu.dma_semaphore, #tpu.memory_space<semaphore_mem>>) src(%73 : memref<1x128xf32, #tpu.memory_space<any>>) dst(%74 : memref<1x128xf32, #tpu.memory_space<vmem>>)
    %c5_i32_52 = arith.constant 5 : i32
    %c0_i32_53 = arith.constant 0 : i32
    %77 = tpu.memref_slice %arg2[%38, %c0_i32_53] : memref<17x128xf32, #tpu.memory_space<any>> -> memref<1x128xf32, #tpu.memory_space<any>>
    %c5_i32_54 = arith.constant 5 : i32
    %c0_i32_55 = arith.constant 0 : i32
    %78 = tpu.memref_slice %arg3[%c5_i32_54, %c0_i32_55] : memref<8x128xf32, #tpu.memory_space<vmem>> -> memref<1x128xf32, #tpu.memory_space<vmem>>
    %79 = tpu.memref_slice %arg4[%c5_i32_52] : memref<8x!tpu.dma_semaphore, #tpu.memory_space<semaphore_mem>> -> memref<1x!tpu.dma_semaphore, #tpu.memory_space<semaphore_mem>>
    %80 = tpu.memref_squeeze %79 : memref<1x!tpu.dma_semaphore, #tpu.memory_space<semaphore_mem>> -> memref<!tpu.dma_semaphore, #tpu.memory_space<semaphore_mem>>
    tpu.wait_dma2 semaphore(%80 : memref<!tpu.dma_semaphore, #tpu.memory_space<semaphore_mem>>) src(%77 : memref<1x128xf32, #tpu.memory_space<any>>) dst(%78 : memref<1x128xf32, #tpu.memory_space<vmem>>)
    %c6_i32_56 = arith.constant 6 : i32
    %c0_i32_57 = arith.constant 0 : i32
    %81 = tpu.memref_slice %arg2[%45, %c0_i32_57] : memref<17x128xf32, #tpu.memory_space<any>> -> memref<1x128xf32, #tpu.memory_space<any>>
    %c6_i32_58 = arith.constant 6 : i32
    %c0_i32_59 = arith.constant 0 : i32
    %82 = tpu.memref_slice %arg3[%c6_i32_58, %c0_i32_59] : memref<8x128xf32, #tpu.memory_space<vmem>> -> memref<1x128xf32, #tpu.memory_space<vmem>>
    %83 = tpu.memref_slice %arg4[%c6_i32_56] : memref<8x!tpu.dma_semaphore, #tpu.memory_space<semaphore_mem>> -> memref<1x!tpu.dma_semaphore, #tpu.memory_space<semaphore_mem>>
    %84 = tpu.memref_squeeze %83 : memref<1x!tpu.dma_semaphore, #tpu.memory_space<semaphore_mem>> -> memref<!tpu.dma_semaphore, #tpu.memory_space<semaphore_mem>>
    tpu.wait_dma2 semaphore(%84 : memref<!tpu.dma_semaphore, #tpu.memory_space<semaphore_mem>>) src(%81 : memref<1x128xf32, #tpu.memory_space<any>>) dst(%82 : memref<1x128xf32, #tpu.memory_space<vmem>>)
    %c7_i32_60 = arith.constant 7 : i32
    %c0_i32_61 = arith.constant 0 : i32
    %85 = tpu.memref_slice %arg2[%52, %c0_i32_61] : memref<17x128xf32, #tpu.memory_space<any>> -> memref<1x128xf32, #tpu.memory_space<any>>
    %c7_i32_62 = arith.constant 7 : i32
    %c0_i32_63 = arith.constant 0 : i32
    %86 = tpu.memref_slice %arg3[%c7_i32_62, %c0_i32_63] : memref<8x128xf32, #tpu.memory_space<vmem>> -> memref<1x128xf32, #tpu.memory_space<vmem>>
    %87 = tpu.memref_slice %arg4[%c7_i32_60] : memref<8x!tpu.dma_semaphore, #tpu.memory_space<semaphore_mem>> -> memref<1x!tpu.dma_semaphore, #tpu.memory_space<semaphore_mem>>
    %88 = tpu.memref_squeeze %87 : memref<1x!tpu.dma_semaphore, #tpu.memory_space<semaphore_mem>> -> memref<!tpu.dma_semaphore, #tpu.memory_space<semaphore_mem>>
    tpu.wait_dma2 semaphore(%88 : memref<!tpu.dma_semaphore, #tpu.memory_space<semaphore_mem>>) src(%85 : memref<1x128xf32, #tpu.memory_space<any>>) dst(%86 : memref<1x128xf32, #tpu.memory_space<vmem>>)
    return
  }
  func.func @transform_1(%arg0: i32, %arg1: memref<8xi32, #tpu.memory_space<smem>>) -> (i32, i32) {
    %c0_i32 = arith.constant 0 : i32
    %c0_i32_0 = arith.constant 0 : i32
    return %arg0, %c0_i32 : i32, i32
  }
}

</mosaic_0001>

<llo_original>
// kernel: tpu_custom_call.1
$region0: #{tpu_custom_call.1}
  #allocation0 [shape = 'u32[]', space=smem, size = 0x4, offset = 0x4, fixed_abs, tag = 'smem constant byte address 0x4 - core index']
  #allocation1 [shape = 'u32[144,128]{1,0:T(1,128)}', space=vmem, size = 0x12000, scoped, tag = 'internal scratch']
  #allocation2 [shape = 's32[8]{0}', space=sflag, size = 0x20, scoped, tag = 'scratch operand']
  #allocation3 [shape = 's32[1]{0}', space=sflag, size = 0x4, scoped, tag = 'scoped memory for tpu_custom_call.1']
  #allocation4 [shape = 'u8[512]{0}', space=smem, size = 0x200, scoped, tag = 'prefetched SMEM operand 0']
  #allocation7 [shape = 's32[]', space=sflag, size = 0x4, offset = 0, fixed_abs, tag = 'sflag constant byte address 0x0 - dummy sync flag']
  #allocation8 [shape = 's32[]', space=sflag, size = 0x4, offset = 0, fixed_abs, tag = 'sflag constant byte address 0x0 - dummy sync flag']
  #allocation9 [shape = 'u32[]', space=smem, size = 0x4, offset = 0x44, fixed_abs, tag = 'smem constant byte address 0x44 - assertion arg 0']
  #allocation10 [shape = 'u32[]', space=smem, size = 0x4, offset = 0x48, fixed_abs, tag = 'smem constant byte address 0x48 - assertion arg 1']
  #allocation11 [shape = 's32[]', space=sflag, size = 0x4, offset = 0, fixed_abs, tag = 'sflag constant byte address 0x0 - dummy sync flag']
  #allocation12 [shape = 's32[]', space=sflag, size = 0x4, offset = 0, fixed_abs, tag = 'sflag constant byte address 0x0 - dummy sync flag']
  #allocation13 [shape = 's32[]', space=sflag, size = 0x4, offset = 0, fixed_abs, tag = 'sflag constant byte address 0x0 - dummy sync flag']
  #allocation14 [shape = 's32[]', space=sflag, size = 0x4, offset = 0, fixed_abs, tag = 'sflag constant byte address 0x0 - dummy sync flag']
  #allocation15 [shape = 's32[]', space=sflag, size = 0x4, offset = 0, fixed_abs, tag = 'sflag constant byte address 0x0 - dummy sync flag']
  #allocation16 [shape = 's32[]', space=sflag, size = 0x4, offset = 0, fixed_abs, tag = 'sflag constant byte address 0x0 - dummy sync flag']
  #allocation17 [shape = 's32[]', space=sflag, size = 0x4, offset = 0, fixed_abs, tag = 'sflag constant byte address 0x0 - dummy sync flag']
  #allocation18 [shape = 's32[]', space=sflag, size = 0x4, offset = 0, fixed_abs, tag = 'sflag constant byte address 0x0 - dummy sync flag']
  #allocation19 [shape = 's32[]', space=sflag, size = 0x4, offset = 0, fixed_abs, tag = 'sflag constant byte address 0x0 - dummy sync flag']
  #allocation20 [shape = 's32[]', space=sflag, size = 0x4, offset = 0, fixed_abs, tag = 'sflag constant byte address 0x0 - dummy sync flag']
  #allocation21 [shape = 's32[]', space=sflag, size = 0x4, offset = 0, fixed_abs, tag = 'sflag constant byte address 0x0 - dummy sync flag']
  #allocation22 [shape = 's32[]', space=sflag, size = 0x4, offset = 0, fixed_abs, tag = 'sflag constant byte address 0x0 - dummy sync flag']
  #allocation23 [shape = 's32[]', space=sflag, size = 0x4, offset = 0, fixed_abs, tag = 'sflag constant byte address 0x0 - dummy sync flag']
  #allocation24 [shape = 's32[]', space=sflag, size = 0x4, offset = 0, fixed_abs, tag = 'sflag constant byte address 0x0 - dummy sync flag']
  %s0 = inlined_call_operand.hbm [shape: s32[8], index: 0, kind: input, shape index: {}]
  %s1 = inlined_call_operand.hbm [shape: f32[17,128], index: 1, kind: input, shape index: {}]
  %s2 = inlined_call_operand.hbm [shape: f32[8,128], index: 2, kind: output, shape index: {}]
  %s3 = sld [smem:[#allocation0]]
  $region42: #{tpu_custom_call.1} parent=0
    _
  %s5 = ssub.s32 1, %s3
  %s6 = scalar_select 0, %s5, %s3
  %8 = dma.hbm_to_smem %s0, 16, [#allocation4], [#allocation3]
  %9 = dma.done [#allocation3], 16
  %10 = sfence
  $region1: #{tpu_custom_call.1} parent=0
    #allocation5 [shape = 'u8[4096]{0}', space=vmem, size = 0x1000, scoped, tag = 'output window, operand 0, single buffered']
    #allocation6 [shape = 's32[1]{0}', space=sflag, size = 0x4, scoped, tag = 'scoped memory for tpu_custom_call.1']
    %11 = vsyncpa [#allocation6], 0
    %s12 = smul.u32 0, 8
    %s13 = sld [smem:[#allocation4 + %s12]]
    %s14 = smul.addr %s13, 16
    %s15 = scalar_lea.hbm %s1, %s14
    // Predicated region
    $region2: #{tpu_custom_call.1} parent=1 // pred_check
      _
    $region3: #{tpu_custom_call.1} parent=1 // pred_check_branch
      %17 = sbr.rel target = $region5
    $region4: #{tpu_custom_call.1} parent=1 // pred_region
      %18 = sst [smem:[#allocation9]] [#allocation8]
      %19 = sst [smem:[#allocation10]] [#allocation7]
    $region5: #{tpu_custom_call.1} parent=1 // pred_fallthru
      _
    %21 = shalt.err (0)
    %s23 = sshll.u32 [#allocation5], 4
    %s24 = int_to_ptr.vmem [resolvable:$true] %s23
    %26 = dma.hbm_to_vmem [thread:$0]  %s15, 16, %s24, [#allocation2]
    %s27 = sadd.s32 %s12, 1
    %s28 = sld [smem:[#allocation4 + %s27]]
    %s29 = smul.addr %s28, 16
    %s30 = scalar_lea.hbm %s1, %s29
    %s31 = scalar_lea.vmem [#allocation5], 1
    %s32 = scalar_lea.sflag [#allocation2], 1
    // Predicated region
    $region6: #{tpu_custom_call.1} parent=1 // pred_check
      _
    $region7: #{tpu_custom_call.1} parent=1 // pred_check_branch
      %34 = sbr.rel target = $region9
    $region8: #{tpu_custom_call.1} parent=1 // pred_region
      %35 = sst [smem:[#allocation9]] [#allocation12]
      %36 = sst [smem:[#allocation10]] [#allocation11]
    $region9: #{tpu_custom_call.1} parent=1 // pred_fallthru
      _
    %38 = shalt.err (0)
    %s40 = sshll.u32 %s31, 4
    %s41 = int_to_ptr.vmem [resolvable:$true] %s40
    %43 = dma.hbm_to_vmem [thread:$0]  %s30, 16, %s41, %s32
    %s44 = sadd.s32 %s12, 2
    %s45 = sld [smem:[#allocation4 + %s44]]
    %s46 = smul.addr %s45, 16
    %s47 = scalar_lea.hbm %s1, %s46
    %s48 = scalar_lea.vmem [#allocation5], 2
    %s49 = scalar_lea.sflag [#allocation2], 2
    // Predicated region
    $region10: #{tpu_custom_call.1} parent=1 // pred_check
      _
    $region11: #{tpu_custom_call.1} parent=1 // pred_check_branch
      %51 = sbr.rel target = $region13
    $region12: #{tpu_custom_call.1} parent=1 // pred_region
      %52 = sst [smem:[#allocation9]] [#allocation14]
      %53 = sst [smem:[#allocation10]] [#allocation13]
    $region13: #{tpu_custom_call.1} parent=1 // pred_fallthru
      _
    %55 = shalt.err (0)
    %s57 = sshll.u32 %s48, 4
    %s58 = int_to_ptr.vmem [resolvable:$true] %s57
    %60 = dma.hbm_to_vmem [thread:$0]  %s47, 16, %s58, %s49
    %s61 = sadd.s32 %s12, 3
    %s62 = sld [smem:[#allocation4 + %s61]]
    %s63 = smul.addr %s62, 16
    %s64 = scalar_lea.hbm %s1, %s63
    %s65 = scalar_lea.vmem [#allocation5], 3
    %s66 = scalar_lea.sflag [#allocation2], 3
    // Predicated region
    $region14: #{tpu_custom_call.1} parent=1 // pred_check
      _
    $region15: #{tpu_custom_call.1} parent=1 // pred_check_branch
      %68 = sbr.rel target = $region17
    $region16: #{tpu_custom_call.1} parent=1 // pred_region
      %69 = sst [smem:[#allocation9]] [#allocation16]
      %70 = sst [smem:[#allocation10]] [#allocation15]
    $region17: #{tpu_custom_call.1} parent=1 // pred_fallthru
      _
    %72 = shalt.err (0)
    %s74 = sshll.u32 %s65, 4
    %s75 = int_to_ptr.vmem [resolvable:$true] %s74
    %77 = dma.hbm_to_vmem [thread:$0]  %s64, 16, %s75, %s66
    %s78 = sadd.s32 %s12, 4
    %s79 = sld [smem:[#allocation4 + %s78]]
    %s80 = smul.addr %s79, 16
    %s81 = scalar_lea.hbm %s1, %s80
    %s82 = scalar_lea.vmem [#allocation5], 4
    %s83 = scalar_lea.sflag [#allocation2], 4
    // Predicated region
    $region18: #{tpu_custom_call.1} parent=1 // pred_check
      _
    $region19: #{tpu_custom_call.1} parent=1 // pred_check_branch
      %85 = sbr.rel target = $region21
    $region20: #{tpu_custom_call.1} parent=1 // pred_region
      %86 = sst [smem:[#allocation9]] [#allocation18]
      %87 = sst [smem:[#allocation10]] [#allocation17]
    $region21: #{tpu_custom_call.1} parent=1 // pred_fallthru
      _
    %89 = shalt.err (0)
    %s91 = sshll.u32 %s82, 4
    %s92 = int_to_ptr.vmem [resolvable:$true] %s91
    %94 = dma.hbm_to_vmem [thread:$0]  %s81, 16, %s92, %s83
    %s95 = sadd.s32 %s12, 5
    %s96 = sld [smem:[#allocation4 + %s95]]
    %s97 = smul.addr %s96, 16
    %s98 = scalar_lea.hbm %s1, %s97
    %s99 = scalar_lea.vmem [#allocation5], 5
    %s100 = scalar_lea.sflag [#allocation2], 5
    // Predicated region
    $region22: #{tpu_custom_call.1} parent=1 // pred_check
      _
    $region23: #{tpu_custom_call.1} parent=1 // pred_check_branch
      %102 = sbr.rel target = $region25
    $region24: #{tpu_custom_call.1} parent=1 // pred_region
      %103 = sst [smem:[#allocation9]] [#allocation20]
      %104 = sst [smem:[#allocation10]] [#allocation19]
    $region25: #{tpu_custom_call.1} parent=1 // pred_fallthru
      _
    %106 = shalt.err (0)
    %s108 = sshll.u32 %s99, 4
    %s109 = int_to_ptr.vmem [resolvable:$true] %s108
    %111 = dma.hbm_to_vmem [thread:$0]  %s98, 16, %s109, %s100
    %s112 = sadd.s32 %s12, 6
    %s113 = sld [smem:[#allocation4 + %s112]]
    %s114 = smul.addr %s113, 16
    %s115 = scalar_lea.hbm %s1, %s114
    %s116 = scalar_lea.vmem [#allocation5], 6
    %s117 = scalar_lea.sflag [#allocation2], 6
    // Predicated region
    $region26: #{tpu_custom_call.1} parent=1 // pred_check
      _
    $region27: #{tpu_custom_call.1} parent=1 // pred_check_branch
      %119 = sbr.rel target = $region29
    $region28: #{tpu_custom_call.1} parent=1 // pred_region
      %120 = sst [smem:[#allocation9]] [#allocation22]
      %121 = sst [smem:[#allocation10]] [#allocation21]
    $region29: #{tpu_custom_call.1} parent=1 // pred_fallthru
      _
    %123 = shalt.err (0)
    %s125 = sshll.u32 %s116, 4
    %s126 = int_to_ptr.vmem [resolvable:$true] %s125
    %128 = dma.hbm_to_vmem [thread:$0]  %s115, 16, %s126, %s117
    %s129 = sadd.s32 %s12, 7
    %s130 = sld [smem:[#allocation4 + %s129]]
    %s131 = smul.addr %s130, 16
    %s132 = scalar_lea.hbm %s1, %s131
    %s133 = scalar_lea.vmem [#allocation5], 7
    %s134 = scalar_lea.sflag [#allocation2], 7
    // Predicated region
    $region30: #{tpu_custom_call.1} parent=1 // pred_check
      _
    $region31: #{tpu_custom_call.1} parent=1 // pred_check_branch
      %136 = sbr.rel target = $region33
    $region32: #{tpu_custom_call.1} parent=1 // pred_region
      %137 = sst [smem:[#allocation9]] [#allocation24]
      %138 = sst [smem:[#allocation10]] [#allocation23]
    $region33: #{tpu_custom_call.1} parent=1 // pred_fallthru
      _
    %140 = shalt.err (0)
    %s142 = sshll.u32 %s133, 4
    %s143 = int_to_ptr.vmem [resolvable:$true] %s142
    %145 = dma.hbm_to_vmem [thread:$0]  %s132, 16, %s143, %s134
    %s146 = smul.u32 1, 1
    %s147 = sshll.u32 %s146, 4
    %148 = dma.done [#allocation2], %s147
    %s149 = sshll.u32 %s146, 4
    %150 = dma.done %s32, %s149
    %s151 = sshll.u32 %s146, 4
    %152 = dma.done %s49, %s151
    %s153 = sshll.u32 %s146, 4
    %154 = dma.done %s66, %s153
    %s155 = sshll.u32 %s146, 4
    %156 = dma.done %s83, %s155
    %s157 = sshll.u32 %s146, 4
    %158 = dma.done %s100, %s157
    %s159 = sshll.u32 %s146, 4
    %160 = dma.done %s117, %s159
    %s161 = sshll.u32 %s146, 4
    %162 = dma.done %s134, %s161
    // Predicated region
    $region34: #{tpu_custom_call.1} parent=1 // pred_check
      _
    $region35: #{tpu_custom_call.1} parent=1 // pred_check_branch
      %164 = sbr.rel (0) target = $region37
    $region36: #{tpu_custom_call.1} parent=1 // pred_region
      %s166 = ssub.s32 128, 128
      %167 = vsyncadd [#allocation6], %s166
      %s169 = sshll.u32 [#allocation5], 4
      %s170 = int_to_ptr.vmem [resolvable:$true] %s169
      %172 = dma.vmem_to_hbm [thread:$0]  %s170, 128, %s2, [#allocation6]
    $region37: #{tpu_custom_call.1} parent=1 // pred_fallthru
      _
    // Predicated region
    $region38: #{tpu_custom_call.1} parent=1 // pred_check
      _
    $region39: #{tpu_custom_call.1} parent=1 // pred_check_branch
      %174 = sbr.rel (0) target = $region41
    $region40: #{tpu_custom_call.1} parent=1 // pred_region
      %175 = dma.done [#allocation6], 128
    $region41: #{tpu_custom_call.1} parent=1 // pred_fallthru
      _
    %176 = vsyncpa [#allocation6], 1
  %177 = vsyncmov [#allocation2]
  %s178 = vpop.sfrf %177
  %p179 = scmp.eq.s32.totalorder %s178, 0
  %p180 = pneg %p179
  %182 = shalt.err (%p180)
  %s183 = scalar_lea.sflag [#allocation2], 1
  %184 = vsyncmov %s183
  %s185 = vpop.sfrf %184
  %p186 = scmp.eq.s32.totalorder %s185, 0
  %p187 = pneg %p186
  %189 = shalt.err (%p187)
  %s190 = scalar_lea.sflag [#allocation2], 2
  %191 = vsyncmov %s190
  %s192 = vpop.sfrf %191
  %p193 = scmp.eq.s32.totalorder %s192, 0
  %p194 = pneg %p193
  %196 = shalt.err (%p194)
  %s197 = scalar_lea.sflag [#allocation2], 3
  %198 = vsyncmov %s197
  %s199 = vpop.sfrf %198
  %p200 = scmp.eq.s32.totalorder %s199, 0
  %p201 = pneg %p200
  %203 = shalt.err (%p201)
  %s204 = scalar_lea.sflag [#allocation2], 4
  %205 = vsyncmov %s204
  %s206 = vpop.sfrf %205
  %p207 = scmp.eq.s32.totalorder %s206, 0
  %p208 = pneg %p207
  %210 = shalt.err (%p208)
  %s211 = scalar_lea.sflag [#allocation2], 5
  %212 = vsyncmov %s211
  %s213 = vpop.sfrf %212
  %p214 = scmp.eq.s32.totalorder %s213, 0
  %p215 = pneg %p214
  %217 = shalt.err (%p215)
  %s218 = scalar_lea.sflag [#allocation2], 6
  %219 = vsyncmov %s218
  %s220 = vpop.sfrf %219
  %p221 = scmp.eq.s32.totalorder %s220, 0
  %p222 = pneg %p221
  %224 = shalt.err (%p222)
  %s225 = scalar_lea.sflag [#allocation2], 7
  %226 = vsyncmov %s225
  %s227 = vpop.sfrf %226
  %p228 = scmp.eq.s32.totalorder %s227, 0
  %p229 = pneg %p228
  %231 = shalt.err (%p229)

</llo_original>
